<compile_context>
chip_gen: v7x
topology: tpu7x:2x2x1
jax: 0.10.0
libtpu: 0.0.40
codegen_flags: <defaults>
</compile_context>

<pallas_src>
import functools

import jax
import jax.numpy as jnp
from jax import lax
from jax.experimental import pallas as pl
from jax.experimental.pallas import tpu as pltpu  # noqa: F401  (kept for TPU-specific tuning hooks)


def _encoder_decoder_kernel(x_ref, enc_ref, dec_ref, out_ref, *,
                            seq_len, batch, hidden, in_dim, out_dim):
    T, B, H, D, O = seq_len, batch, hidden, in_dim, out_dim

    # Packed encoder params (static, 8-aligned row slices of one VMEM operand).
    wih = enc_ref[0:D, :]                     # (D, 4H)   gate columns in [i,f,g,o] order
    whh = enc_ref[D:D + H, :]                 # (H, 4H)
    bias = enc_ref[D + H:D + H + 1, :]        # (1, 4H)   fused b_ih + b_hh

    # ---- Phase 1 (time-parallel): one MXU GEMM for every timestep's input projection.
    # Result kept as a value (8 vregs) — no VMEM scratch round-trip.
    x_all = x_ref[...].reshape(T * B, D)                                  # (T*B, D)
    gx = jnp.dot(x_all, wih, preferred_element_type=jnp.float32) + bias   # (T*B, 4H)
    gx = gx.reshape(T, B, 4 * H)                                          # (T, B, 4H)

    # ---- Phase 2 (serial): recurrence over time; h/c live in vregs.  T is tiny and
    # static, so a Python loop fully unrolls at trace time and gx[t] is a STATIC slice.
    h = jnp.zeros((B, H), jnp.float32)
    c = jnp.zeros((B, H), jnp.float32)
    for t in range(T):
        gates = gx[t] + jnp.dot(h, whh, preferred_element_type=jnp.float32)  # (B, 4H)
        # Two full-vreg EUP passes instead of four masked quarter-vreg passes.
        sig = 0.5 * (jnp.tanh(0.5 * gates) + 1.0)   # exact sigmoid via tanh (no divide)
        tnh = jnp.tanh(gates)
        i_g = sig[:, 0 * H:1 * H]
        f_g = sig[:, 1 * H:2 * H]
        g_g = tnh[:, 2 * H:3 * H]
        o_g = sig[:, 3 * H:4 * H]
        c = f_g * c + i_g * g_g
        h = o_g * jnp.tanh(c)

    # ---- Phase 3: decoder Linear on the final hidden state (== decoder(hc[0])).
    wdec = dec_ref[0:H, :]                    # (H, O)
    bdec = dec_ref[H:H + 1, :]                # (1, O)
    y = jnp.dot(h, wdec, preferred_element_type=jnp.float32) + bdec
    out_ref[...] = y.astype(out_ref.dtype)


def prepare_params(params):
    """One-time parameter prep (constant across calls): transpose + pack + fuse bias."""
    w_ih, w_hh, b_ih, b_hh, w_dec, b_dec = (
        params["w_ih"], params["w_hh"], params["b_ih"], params["b_hh"],
        params["w_dec"], params["b_dec"])
    H = w_hh.shape[1]
    O = w_dec.shape[0]
    enc_pack = jnp.concatenate(
        [jnp.transpose(w_ih),                         # (D, 4H)
         jnp.transpose(w_hh),                         # (H, 4H)
         (b_ih + b_hh).reshape(1, 4 * H)],            # (1, 4H)
        axis=0).astype(jnp.float32)                   # (D+H+1, 4H)
    dec_pack = jnp.concatenate(
        [jnp.transpose(w_dec),                        # (H, O)
         b_dec.reshape(1, O)],                        # (1, O)
        axis=0).astype(jnp.float32)                   # (H+1, O)
    return enc_pack, dec_pack


def encoder_n_decoder(x_btd, enc_pack, dec_pack):
    """x_btd: (B, T, D) float32 (batch_first). Returns (1, B, O) like decoder(hc[0])."""
    B, T, D = x_btd.shape
    H = (enc_pack.shape[0] - D - 1)
    O = dec_pack.shape[1]
    assert enc_pack.shape == (D + H + 1, 4 * H)
    assert dec_pack.shape == (H + 1, O)

    # Only per-call glue: time-major transpose of x (tiny).
    x_tbd = jnp.transpose(x_btd, (1, 0, 2))           # (T, B, D)

    kernel = functools.partial(_encoder_decoder_kernel,
                               seq_len=T, batch=B, hidden=H, in_dim=D, out_dim=O)

    out = pl.pallas_call(
        kernel,
        out_shape=jax.ShapeDtypeStruct((B, O), jnp.float32),
        # No grid / no BlockSpecs: single invocation, full arrays resident in VMEM
        # (3 input DMAs total; footprint << 64 MiB even on v7x).
    )(x_tbd, enc_pack, dec_pack)

    return out.reshape(1, B, O)                        # hc[0] has num_layers=1 lead dim


def _reference(x_btd, params):
    """Pure-JAX reference matching PyTorch nn.LSTM + Linear semantics."""
    w_ih, w_hh, b_ih, b_hh, w_dec, b_dec = (
        params["w_ih"], params["w_hh"], params["b_ih"], params["b_hh"],
        params["w_dec"], params["b_dec"])
    B, T, D = x_btd.shape
    H = w_hh.shape[1]

    def step(carry, x_t):
        h, c = carry
        gates = x_t @ w_ih.T + b_ih + h @ w_hh.T + b_hh
        i = jax.nn.sigmoid(gates[:, 0 * H:1 * H])
        f = jax.nn.sigmoid(gates[:, 1 * H:2 * H])
        g = jnp.tanh(gates[:, 2 * H:3 * H])
        o = jax.nn.sigmoid(gates[:, 3 * H:4 * H])
        c = f * c + i * g
        h = o * jnp.tanh(c)
        return (h, c), None

    h0 = jnp.zeros((B, H), jnp.float32)
    c0 = jnp.zeros((B, H), jnp.float32)
    (h, _), _ = lax.scan(step, (h0, c0), jnp.transpose(x_btd, (1, 0, 2)))
    y = h @ w_dec.T + b_dec
    return y.reshape(1, B, -1)


if __name__ == "__main__":
    B, T, D, H, O = 8, 8, 16, 32, 16

    key = jax.random.PRNGKey(0)
    ks = jax.random.split(key, 7)
    scale = 0.1
    params = {
        "w_ih": scale * jax.random.normal(ks[0], (4 * H, D), jnp.float32),
        "w_hh": scale * jax.random.normal(ks[1], (4 * H, H), jnp.float32),
        "b_ih": scale * jax.random.normal(ks[2], (4 * H,), jnp.float32),
        "b_hh": scale * jax.random.normal(ks[3], (4 * H,), jnp.float32),
        "w_dec": scale * jax.random.normal(ks[4], (O, H), jnp.float32),
        "b_dec": scale * jax.random.normal(ks[5], (O,), jnp.float32),
    }
    x = jax.random.normal(ks[6], (B, T, D), jnp.float32)

    # One-time parameter preparation (outside the per-call path).
    enc_pack, dec_pack = prepare_params(params)
    enc_pack, dec_pack = jax.block_until_ready((enc_pack, dec_pack))

    y = encoder_n_decoder(x, enc_pack, dec_pack)
    y = jax.block_until_ready(y)

    y_ref = _reference(x, params)
    assert y.shape == (1, B, O)
    assert jnp.allclose(y, y_ref, atol=1e-5, rtol=1e-5), "mismatch vs reference"

    print("KERNEL_OK")
</pallas_src>

<mosaic_0001>
module attributes {stable_mosaic.version = 11 : i64} {
  func.func @_encoder_decoder_kernel(%arg0: memref<8x8x16xf32, #tpu.memory_space<vmem>>, %arg1: memref<49x128xf32, #tpu.memory_space<vmem>>, %arg2: memref<33x16xf32, #tpu.memory_space<vmem>>, %arg3: memref<8x16xf32, #tpu.memory_space<vmem>>) attributes {dimension_semantics = [], scalar_prefetch = 0 : i64, scratch_operands = 0 : i64, tpu.core_type = #tpu.core_type<tc>} {
    %c0 = arith.constant 0 : index
    %c0_0 = arith.constant 0 : index
    %0 = vector.load %arg1[%c0, %c0_0] : memref<49x128xf32, #tpu.memory_space<vmem>>, vector<16x128xf32>
    %c16 = arith.constant 16 : index
    %c0_1 = arith.constant 0 : index
    %1 = vector.load %arg1[%c16, %c0_1] : memref<49x128xf32, #tpu.memory_space<vmem>>, vector<32x128xf32>
    %c48 = arith.constant 48 : index
    %c0_2 = arith.constant 0 : index
    %2 = vector.load %arg1[%c48, %c0_2] : memref<49x128xf32, #tpu.memory_space<vmem>>, vector<1x128xf32>
    %c0_3 = arith.constant 0 : index
    %c0_4 = arith.constant 0 : index
    %c0_5 = arith.constant 0 : index
    %3 = vector.load %arg0[%c0_3, %c0_4, %c0_5] : memref<8x8x16xf32, #tpu.memory_space<vmem>>, vector<8x8x16xf32>
    %4 = vector.shape_cast %3 : vector<8x8x16xf32> to vector<64x16xf32>
    %cst = arith.constant dense<0.000000e+00> : vector<64x128xf32>
    %5 = tpu.matmul %4, %0, %cst {dimension_numbers = #tpu.dot_dimension_numbers<[1], [0], [0], [1], [0, 0, 1, 1], [], []>} : vector<64x16xf32>, vector<16x128xf32>, vector<64x128xf32> -> vector<64x128xf32>
    %6 = vector.broadcast %2 : vector<1x128xf32> to vector<64x128xf32>
    %7 = arith.addf %5, %6 : vector<64x128xf32>
    %8 = vector.shape_cast %7 : vector<64x128xf32> to vector<8x8x128xf32>
    %cst_6 = arith.constant 0.000000e+00 : f32
    %9 = vector.broadcast %cst_6 : f32 to vector<8x32xf32>
    %cst_7 = arith.constant 0.000000e+00 : f32
    %10 = vector.broadcast %cst_7 : f32 to vector<8x32xf32>
    %11 = vector.extract_strided_slice %8 {offsets = [0, 0, 0], sizes = [1, 8, 128], strides = [1, 1, 1]} : vector<8x8x128xf32> to vector<1x8x128xf32>
    %12 = vector.shape_cast %11 : vector<1x8x128xf32> to vector<8x128xf32>
    %cst_8 = arith.constant dense<0.000000e+00> : vector<8x128xf32>
    %13 = tpu.matmul %9, %1, %cst_8 {dimension_numbers = #tpu.dot_dimension_numbers<[1], [0], [0], [1], [0, 0, 1, 1], [], []>} : vector<8x32xf32>, vector<32x128xf32>, vector<8x128xf32> -> vector<8x128xf32>
    %14 = arith.addf %12, %13 : vector<8x128xf32>
    %cst_9 = arith.constant 5.000000e-01 : f32
    %15 = vector.broadcast %cst_9 : f32 to vector<8x128xf32>
    %16 = arith.mulf %15, %14 : vector<8x128xf32>
    %17 = math.tanh %16 : vector<8x128xf32>
    %cst_10 = arith.constant 1.000000e+00 : f32
    %18 = vector.broadcast %cst_10 : f32 to vector<8x128xf32>
    %19 = arith.addf %17, %18 : vector<8x128xf32>
    %cst_11 = arith.constant 5.000000e-01 : f32
    %20 = vector.broadcast %cst_11 : f32 to vector<8x128xf32>
    %21 = arith.mulf %20, %19 : vector<8x128xf32>
    %22 = math.tanh %14 : vector<8x128xf32>
    %23 = vector.extract_strided_slice %21 {offsets = [0, 0], sizes = [8, 32], strides = [1, 1]} : vector<8x128xf32> to vector<8x32xf32>
    %24 = vector.extract_strided_slice %21 {offsets = [0, 32], sizes = [8, 32], strides = [1, 1]} : vector<8x128xf32> to vector<8x32xf32>
    %25 = vector.extract_strided_slice %22 {offsets = [0, 64], sizes = [8, 32], strides = [1, 1]} : vector<8x128xf32> to vector<8x32xf32>
    %26 = vector.extract_strided_slice %21 {offsets = [0, 96], sizes = [8, 32], strides = [1, 1]} : vector<8x128xf32> to vector<8x32xf32>
    %27 = arith.mulf %24, %10 : vector<8x32xf32>
    %28 = arith.mulf %23, %25 : vector<8x32xf32>
    %29 = arith.addf %27, %28 : vector<8x32xf32>
    %30 = math.tanh %29 : vector<8x32xf32>
    %31 = arith.mulf %26, %30 : vector<8x32xf32>
    %32 = vector.extract_strided_slice %8 {offsets = [1, 0, 0], sizes = [1, 8, 128], strides = [1, 1, 1]} : vector<8x8x128xf32> to vector<1x8x128xf32>
    %33 = vector.shape_cast %32 : vector<1x8x128xf32> to vector<8x128xf32>
    %cst_12 = arith.constant dense<0.000000e+00> : vector<8x128xf32>
    %34 = tpu.matmul %31, %1, %cst_12 {dimension_numbers = #tpu.dot_dimension_numbers<[1], [0], [0], [1], [0, 0, 1, 1], [], []>} : vector<8x32xf32>, vector<32x128xf32>, vector<8x128xf32> -> vector<8x128xf32>
    %35 = arith.addf %33, %34 : vector<8x128xf32>
    %cst_13 = arith.constant 5.000000e-01 : f32
    %36 = vector.broadcast %cst_13 : f32 to vector<8x128xf32>
    %37 = arith.mulf %36, %35 : vector<8x128xf32>
    %38 = math.tanh %37 : vector<8x128xf32>
    %cst_14 = arith.constant 1.000000e+00 : f32
    %39 = vector.broadcast %cst_14 : f32 to vector<8x128xf32>
    %40 = arith.addf %38, %39 : vector<8x128xf32>
    %cst_15 = arith.constant 5.000000e-01 : f32
    %41 = vector.broadcast %cst_15 : f32 to vector<8x128xf32>
    %42 = arith.mulf %41, %40 : vector<8x128xf32>
    %43 = math.tanh %35 : vector<8x128xf32>
    %44 = vector.extract_strided_slice %42 {offsets = [0, 0], sizes = [8, 32], strides = [1, 1]} : vector<8x128xf32> to vector<8x32xf32>
    %45 = vector.extract_strided_slice %42 {offsets = [0, 32], sizes = [8, 32], strides = [1, 1]} : vector<8x128xf32> to vector<8x32xf32>
    %46 = vector.extract_strided_slice %43 {offsets = [0, 64], sizes = [8, 32], strides = [1, 1]} : vector<8x128xf32> to vector<8x32xf32>
    %47 = vector.extract_strided_slice %42 {offsets = [0, 96], sizes = [8, 32], strides = [1, 1]} : vector<8x128xf32> to vector<8x32xf32>
    %48 = arith.mulf %45, %29 : vector<8x32xf32>
    %49 = arith.mulf %44, %46 : vector<8x32xf32>
    %50 = arith.addf %48, %49 : vector<8x32xf32>
    %51 = math.tanh %50 : vector<8x32xf32>
    %52 = arith.mulf %47, %51 : vector<8x32xf32>
    %53 = vector.extract_strided_slice %8 {offsets = [2, 0, 0], sizes = [1, 8, 128], strides = [1, 1, 1]} : vector<8x8x128xf32> to vector<1x8x128xf32>
    %54 = vector.shape_cast %53 : vector<1x8x128xf32> to vector<8x128xf32>
    %cst_16 = arith.constant dense<0.000000e+00> : vector<8x128xf32>
    %55 = tpu.matmul %52, %1, %cst_16 {dimension_numbers = #tpu.dot_dimension_numbers<[1], [0], [0], [1], [0, 0, 1, 1], [], []>} : vector<8x32xf32>, vector<32x128xf32>, vector<8x128xf32> -> vector<8x128xf32>
    %56 = arith.addf %54, %55 : vector<8x128xf32>
    %cst_17 = arith.constant 5.000000e-01 : f32
    %57 = vector.broadcast %cst_17 : f32 to vector<8x128xf32>
    %58 = arith.mulf %57, %56 : vector<8x128xf32>
    %59 = math.tanh %58 : vector<8x128xf32>
    %cst_18 = arith.constant 1.000000e+00 : f32
    %60 = vector.broadcast %cst_18 : f32 to vector<8x128xf32>
    %61 = arith.addf %59, %60 : vector<8x128xf32>
    %cst_19 = arith.constant 5.000000e-01 : f32
    %62 = vector.broadcast %cst_19 : f32 to vector<8x128xf32>
    %63 = arith.mulf %62, %61 : vector<8x128xf32>
    %64 = math.tanh %56 : vector<8x128xf32>
    %65 = vector.extract_strided_slice %63 {offsets = [0, 0], sizes = [8, 32], strides = [1, 1]} : vector<8x128xf32> to vector<8x32xf32>
    %66 = vector.extract_strided_slice %63 {offsets = [0, 32], sizes = [8, 32], strides = [1, 1]} : vector<8x128xf32> to vector<8x32xf32>
    %67 = vector.extract_strided_slice %64 {offsets = [0, 64], sizes = [8, 32], strides = [1, 1]} : vector<8x128xf32> to vector<8x32xf32>
    %68 = vector.extract_strided_slice %63 {offsets = [0, 96], sizes = [8, 32], strides = [1, 1]} : vector<8x128xf32> to vector<8x32xf32>
    %69 = arith.mulf %66, %50 : vector<8x32xf32>
    %70 = arith.mulf %65, %67 : vector<8x32xf32>
    %71 = arith.addf %69, %70 : vector<8x32xf32>
    %72 = math.tanh %71 : vector<8x32xf32>
    %73 = arith.mulf %68, %72 : vector<8x32xf32>
    %74 = vector.extract_strided_slice %8 {offsets = [3, 0, 0], sizes = [1, 8, 128], strides = [1, 1, 1]} : vector<8x8x128xf32> to vector<1x8x128xf32>
    %75 = vector.shape_cast %74 : vector<1x8x128xf32> to vector<8x128xf32>
    %cst_20 = arith.constant dense<0.000000e+00> : vector<8x128xf32>
    %76 = tpu.matmul %73, %1, %cst_20 {dimension_numbers = #tpu.dot_dimension_numbers<[1], [0], [0], [1], [0, 0, 1, 1], [], []>} : vector<8x32xf32>, vector<32x128xf32>, vector<8x128xf32> -> vector<8x128xf32>
    %77 = arith.addf %75, %76 : vector<8x128xf32>
    %cst_21 = arith.constant 5.000000e-01 : f32
    %78 = vector.broadcast %cst_21 : f32 to vector<8x128xf32>
    %79 = arith.mulf %78, %77 : vector<8x128xf32>
    %80 = math.tanh %79 : vector<8x128xf32>
    %cst_22 = arith.constant 1.000000e+00 : f32
    %81 = vector.broadcast %cst_22 : f32 to vector<8x128xf32>
    %82 = arith.addf %80, %81 : vector<8x128xf32>
    %cst_23 = arith.constant 5.000000e-01 : f32
    %83 = vector.broadcast %cst_23 : f32 to vector<8x128xf32>
    %84 = arith.mulf %83, %82 : vector<8x128xf32>
    %85 = math.tanh %77 : vector<8x128xf32>
    %86 = vector.extract_strided_slice %84 {offsets = [0, 0], sizes = [8, 32], strides = [1, 1]} : vector<8x128xf32> to vector<8x32xf32>
    %87 = vector.extract_strided_slice %84 {offsets = [0, 32], sizes = [8, 32], strides = [1, 1]} : vector<8x128xf32> to vector<8x32xf32>
    %88 = vector.extract_strided_slice %85 {offsets = [0, 64], sizes = [8, 32], strides = [1, 1]} : vector<8x128xf32> to vector<8x32xf32>
    %89 = vector.extract_strided_slice %84 {offsets = [0, 96], sizes = [8, 32], strides = [1, 1]} : vector<8x128xf32> to vector<8x32xf32>
    %90 = arith.mulf %87, %71 : vector<8x32xf32>
    %91 = arith.mulf %86, %88 : vector<8x32xf32>
    %92 = arith.addf %90, %91 : vector<8x32xf32>
    %93 = math.tanh %92 : vector<8x32xf32>
    %94 = arith.mulf %89, %93 : vector<8x32xf32>
    %95 = vector.extract_strided_slice %8 {offsets = [4, 0, 0], sizes = [1, 8, 128], strides = [1, 1, 1]} : vector<8x8x128xf32> to vector<1x8x128xf32>
    %96 = vector.shape_cast %95 : vector<1x8x128xf32> to vector<8x128xf32>
    %cst_24 = arith.constant dense<0.000000e+00> : vector<8x128xf32>
    %97 = tpu.matmul %94, %1, %cst_24 {dimension_numbers = #tpu.dot_dimension_numbers<[1], [0], [0], [1], [0, 0, 1, 1], [], []>} : vector<8x32xf32>, vector<32x128xf32>, vector<8x128xf32> -> vector<8x128xf32>
    %98 = arith.addf %96, %97 : vector<8x128xf32>
    %cst_25 = arith.constant 5.000000e-01 : f32
    %99 = vector.broadcast %cst_25 : f32 to vector<8x128xf32>
    %100 = arith.mulf %99, %98 : vector<8x128xf32>
    %101 = math.tanh %100 : vector<8x128xf32>
    %cst_26 = arith.constant 1.000000e+00 : f32
    %102 = vector.broadcast %cst_26 : f32 to vector<8x128xf32>
    %103 = arith.addf %101, %102 : vector<8x128xf32>
    %cst_27 = arith.constant 5.000000e-01 : f32
    %104 = vector.broadcast %cst_27 : f32 to vector<8x128xf32>
    %105 = arith.mulf %104, %103 : vector<8x128xf32>
    %106 = math.tanh %98 : vector<8x128xf32>
    %107 = vector.extract_strided_slice %105 {offsets = [0, 0], sizes = [8, 32], strides = [1, 1]} : vector<8x128xf32> to vector<8x32xf32>
    %108 = vector.extract_strided_slice %105 {offsets = [0, 32], sizes = [8, 32], strides = [1, 1]} : vector<8x128xf32> to vector<8x32xf32>
    %109 = vector.extract_strided_slice %106 {offsets = [0, 64], sizes = [8, 32], strides = [1, 1]} : vector<8x128xf32> to vector<8x32xf32>
    %110 = vector.extract_strided_slice %105 {offsets = [0, 96], sizes = [8, 32], strides = [1, 1]} : vector<8x128xf32> to vector<8x32xf32>
    %111 = arith.mulf %108, %92 : vector<8x32xf32>
    %112 = arith.mulf %107, %109 : vector<8x32xf32>
    %113 = arith.addf %111, %112 : vector<8x32xf32>
    %114 = math.tanh %113 : vector<8x32xf32>
    %115 = arith.mulf %110, %114 : vector<8x32xf32>
    %116 = vector.extract_strided_slice %8 {offsets = [5, 0, 0], sizes = [1, 8, 128], strides = [1, 1, 1]} : vector<8x8x128xf32> to vector<1x8x128xf32>
    %117 = vector.shape_cast %116 : vector<1x8x128xf32> to vector<8x128xf32>
    %cst_28 = arith.constant dense<0.000000e+00> : vector<8x128xf32>
    %118 = tpu.matmul %115, %1, %cst_28 {dimension_numbers = #tpu.dot_dimension_numbers<[1], [0], [0], [1], [0, 0, 1, 1], [], []>} : vector<8x32xf32>, vector<32x128xf32>, vector<8x128xf32> -> vector<8x128xf32>
    %119 = arith.addf %117, %118 : vector<8x128xf32>
    %cst_29 = arith.constant 5.000000e-01 : f32
    %120 = vector.broadcast %cst_29 : f32 to vector<8x128xf32>
    %121 = arith.mulf %120, %119 : vector<8x128xf32>
    %122 = math.tanh %121 : vector<8x128xf32>
    %cst_30 = arith.constant 1.000000e+00 : f32
    %123 = vector.broadcast %cst_30 : f32 to vector<8x128xf32>
    %124 = arith.addf %122, %123 : vector<8x128xf32>
    %cst_31 = arith.constant 5.000000e-01 : f32
    %125 = vector.broadcast %cst_31 : f32 to vector<8x128xf32>
    %126 = arith.mulf %125, %124 : vector<8x128xf32>
    %127 = math.tanh %119 : vector<8x128xf32>
    %128 = vector.extract_strided_slice %126 {offsets = [0, 0], sizes = [8, 32], strides = [1, 1]} : vector<8x128xf32> to vector<8x32xf32>
    %129 = vector.extract_strided_slice %126 {offsets = [0, 32], sizes = [8, 32], strides = [1, 1]} : vector<8x128xf32> to vector<8x32xf32>
    %130 = vector.extract_strided_slice %127 {offsets = [0, 64], sizes = [8, 32], strides = [1, 1]} : vector<8x128xf32> to vector<8x32xf32>
    %131 = vector.extract_strided_slice %126 {offsets = [0, 96], sizes = [8, 32], strides = [1, 1]} : vector<8x128xf32> to vector<8x32xf32>
    %132 = arith.mulf %129, %113 : vector<8x32xf32>
    %133 = arith.mulf %128, %130 : vector<8x32xf32>
    %134 = arith.addf %132, %133 : vector<8x32xf32>
    %135 = math.tanh %134 : vector<8x32xf32>
    %136 = arith.mulf %131, %135 : vector<8x32xf32>
    %137 = vector.extract_strided_slice %8 {offsets = [6, 0, 0], sizes = [1, 8, 128], strides = [1, 1, 1]} : vector<8x8x128xf32> to vector<1x8x128xf32>
    %138 = vector.shape_cast %137 : vector<1x8x128xf32> to vector<8x128xf32>
    %cst_32 = arith.constant dense<0.000000e+00> : vector<8x128xf32>
    %139 = tpu.matmul %136, %1, %cst_32 {dimension_numbers = #tpu.dot_dimension_numbers<[1], [0], [0], [1], [0, 0, 1, 1], [], []>} : vector<8x32xf32>, vector<32x128xf32>, vector<8x128xf32> -> vector<8x128xf32>
    %140 = arith.addf %138, %139 : vector<8x128xf32>
    %cst_33 = arith.constant 5.000000e-01 : f32
    %141 = vector.broadcast %cst_33 : f32 to vector<8x128xf32>
    %142 = arith.mulf %141, %140 : vector<8x128xf32>
    %143 = math.tanh %142 : vector<8x128xf32>
    %cst_34 = arith.constant 1.000000e+00 : f32
    %144 = vector.broadcast %cst_34 : f32 to vector<8x128xf32>
    %145 = arith.addf %143, %144 : vector<8x128xf32>
    %cst_35 = arith.constant 5.000000e-01 : f32
    %146 = vector.broadcast %cst_35 : f32 to vector<8x128xf32>
    %147 = arith.mulf %146, %145 : vector<8x128xf32>
    %148 = math.tanh %140 : vector<8x128xf32>
    %149 = vector.extract_strided_slice %147 {offsets = [0, 0], sizes = [8, 32], strides = [1, 1]} : vector<8x128xf32> to vector<8x32xf32>
    %150 = vector.extract_strided_slice %147 {offsets = [0, 32], sizes = [8, 32], strides = [1, 1]} : vector<8x128xf32> to vector<8x32xf32>
    %151 = vector.extract_strided_slice %148 {offsets = [0, 64], sizes = [8, 32], strides = [1, 1]} : vector<8x128xf32> to vector<8x32xf32>
    %152 = vector.extract_strided_slice %147 {offsets = [0, 96], sizes = [8, 32], strides = [1, 1]} : vector<8x128xf32> to vector<8x32xf32>
    %153 = arith.mulf %150, %134 : vector<8x32xf32>
    %154 = arith.mulf %149, %151 : vector<8x32xf32>
    %155 = arith.addf %153, %154 : vector<8x32xf32>
    %156 = math.tanh %155 : vector<8x32xf32>
    %157 = arith.mulf %152, %156 : vector<8x32xf32>
    %158 = vector.extract_strided_slice %8 {offsets = [7, 0, 0], sizes = [1, 8, 128], strides = [1, 1, 1]} : vector<8x8x128xf32> to vector<1x8x128xf32>
    %159 = vector.shape_cast %158 : vector<1x8x128xf32> to vector<8x128xf32>
    %cst_36 = arith.constant dense<0.000000e+00> : vector<8x128xf32>
    %160 = tpu.matmul %157, %1, %cst_36 {dimension_numbers = #tpu.dot_dimension_numbers<[1], [0], [0], [1], [0, 0, 1, 1], [], []>} : vector<8x32xf32>, vector<32x128xf32>, vector<8x128xf32> -> vector<8x128xf32>
    %161 = arith.addf %159, %160 : vector<8x128xf32>
    %cst_37 = arith.constant 5.000000e-01 : f32
    %162 = vector.broadcast %cst_37 : f32 to vector<8x128xf32>
    %163 = arith.mulf %162, %161 : vector<8x128xf32>
    %164 = math.tanh %163 : vector<8x128xf32>
    %cst_38 = arith.constant 1.000000e+00 : f32
    %165 = vector.broadcast %cst_38 : f32 to vector<8x128xf32>
    %166 = arith.addf %164, %165 : vector<8x128xf32>
    %cst_39 = arith.constant 5.000000e-01 : f32
    %167 = vector.broadcast %cst_39 : f32 to vector<8x128xf32>
    %168 = arith.mulf %167, %166 : vector<8x128xf32>
    %169 = math.tanh %161 : vector<8x128xf32>
    %170 = vector.extract_strided_slice %168 {offsets = [0, 0], sizes = [8, 32], strides = [1, 1]} : vector<8x128xf32> to vector<8x32xf32>
    %171 = vector.extract_strided_slice %168 {offsets = [0, 32], sizes = [8, 32], strides = [1, 1]} : vector<8x128xf32> to vector<8x32xf32>
    %172 = vector.extract_strided_slice %169 {offsets = [0, 64], sizes = [8, 32], strides = [1, 1]} : vector<8x128xf32> to vector<8x32xf32>
    %173 = vector.extract_strided_slice %168 {offsets = [0, 96], sizes = [8, 32], strides = [1, 1]} : vector<8x128xf32> to vector<8x32xf32>
    %174 = arith.mulf %171, %155 : vector<8x32xf32>
    %175 = arith.mulf %170, %172 : vector<8x32xf32>
    %176 = arith.addf %174, %175 : vector<8x32xf32>
    %177 = math.tanh %176 : vector<8x32xf32>
    %178 = arith.mulf %173, %177 : vector<8x32xf32>
    %c0_40 = arith.constant 0 : index
    %c0_41 = arith.constant 0 : index
    %179 = vector.load %arg2[%c0_40, %c0_41] : memref<33x16xf32, #tpu.memory_space<vmem>>, vector<32x16xf32>
    %c32 = arith.constant 32 : index
    %c0_42 = arith.constant 0 : index
    %180 = vector.load %arg2[%c32, %c0_42] : memref<33x16xf32, #tpu.memory_space<vmem>>, vector<1x16xf32>
    %cst_43 = arith.constant dense<0.000000e+00> : vector<8x16xf32>
    %181 = tpu.matmul %178, %179, %cst_43 {dimension_numbers = #tpu.dot_dimension_numbers<[1], [0], [0], [1], [0, 0, 1, 1], [], []>} : vector<8x32xf32>, vector<32x16xf32>, vector<8x16xf32> -> vector<8x16xf32>
    %182 = vector.broadcast %180 : vector<1x16xf32> to vector<8x16xf32>
    %183 = arith.addf %181, %182 : vector<8x16xf32>
    %c0_44 = arith.constant 0 : index
    %c0_45 = arith.constant 0 : index
    %184 = vector.load %arg3[%c0_44, %c0_45] : memref<8x16xf32, #tpu.memory_space<vmem>>, vector<8x16xf32>
    tpu.vector_store %arg3[%c0_44, %c0_45], %183 {strides = array<i32>} : memref<8x16xf32, #tpu.memory_space<vmem>>, vector<8x16xf32>,
    return
  }
}

</mosaic_0001>

<llo_original>
// kernel: tpu_custom_call.1
$region0: #{tpu_custom_call.1}
  #allocation0 [shape = 'u32[]', space=smem, size = 0x4, offset = 0x4, fixed_abs, tag = 'smem constant byte address 0x4 - core index']
  #allocation1 [shape = 'u32[144,128]{1,0:T(1,128)}', space=vmem, size = 0x12000, scoped, tag = 'internal scratch']
  %s0 = inlined_call_operand.hbm [shape: f32[8,8,16], index: 0, kind: input, shape index: {}]
  %s1 = inlined_call_operand.vmem [shape: f32[49,128], index: 1, kind: input, shape index: {}]
  %s2 = inlined_call_operand.vmem [shape: f32[33,16], index: 2, kind: input, shape index: {}]
  %s3 = inlined_call_operand.hbm [shape: f32[8,16], index: 3, kind: output, shape index: {}]
  %s4 = sld [smem:[#allocation0]]
  $region26: #{tpu_custom_call.1} parent=0
    _
  %s6 = ssub.s32 1, %s4
  %s7 = scalar_select 0, %s6, %s4
  $region1: #{tpu_custom_call.1} parent=0
    #allocation2 [shape = 'u8[32768]{0}', space=vmem, size = 0x8000, scoped, tag = 'input window, operand 0, single buffered']
    #allocation3 [shape = 's32[1]{0}', space=sflag, size = 0x4, scoped, tag = 'scoped memory for tpu_custom_call.1']
    #allocation4 [shape = 's32[1]{0}', space=sflag, size = 0x4, scoped, tag = 'scoped memory for tpu_custom_call.1']
    #allocation5 [shape = 'u8[4096]{0}', space=vmem, size = 0x1000, scoped, tag = 'output window, operand 0, single buffered']
    %8 = vsyncpa [#allocation3], 0
    %9 = vsyncpa [#allocation4], 0
    // Predicated region
    $region2: #{tpu_custom_call.1} parent=1 // pred_check
      _
    $region3: #{tpu_custom_call.1} parent=1 // pred_check_branch
      %11 = sbr.rel (0) target = $region5
    $region4: #{tpu_custom_call.1} parent=1 // pred_region
      %s13 = ssub.s32 1024, 1024
      %14 = vsyncadd [#allocation3], %s13
      %s15 = sshll.u32 [#allocation2], 4
      %s16 = int_to_ptr.vmem [resolvable:$true] %s15
      %21 = dma.hbm_to_vmem [thread:$0]  %s0, 1024, %s16, [#allocation3], 128, 128, 8
    $region5: #{tpu_custom_call.1} parent=1 // pred_fallthru
      _
    // Predicated region
    $region6: #{tpu_custom_call.1} parent=1 // pred_check
      _
    $region7: #{tpu_custom_call.1} parent=1 // pred_check_branch
      %23 = sbr.rel (0) target = $region9
    $region8: #{tpu_custom_call.1} parent=1 // pred_region
      _
    $region9: #{tpu_custom_call.1} parent=1 // pred_fallthru
      _
    // Predicated region
    $region10: #{tpu_custom_call.1} parent=1 // pred_check
      _
    $region11: #{tpu_custom_call.1} parent=1 // pred_check_branch
      %25 = sbr.rel (0) target = $region13
    $region12: #{tpu_custom_call.1} parent=1 // pred_region
      _
    $region13: #{tpu_custom_call.1} parent=1 // pred_fallthru
      _
    // Predicated region
    $region14: #{tpu_custom_call.1} parent=1 // pred_check
      _
    $region15: #{tpu_custom_call.1} parent=1 // pred_check_branch
      %27 = sbr.rel (0) target = $region17
    $region16: #{tpu_custom_call.1} parent=1 // pred_region
      %28 = dma.done [#allocation3], 1024
    $region17: #{tpu_custom_call.1} parent=1 // pred_fallthru
      _
    %v29 = vld [vmem:[%s1] sm:$0xff]
    %v30 = vld [vmem:[%s1 + $0x8] sm:$0xff]
    %v31 = vld [vmem:[%s1 + $0x10] sm:$0xff]
    %v32 = vld [vmem:[%s1 + $0x18] sm:$0xff]
    %v33 = vld [vmem:[%s1 + $0x20] sm:$0xff]
    %v34 = vld [vmem:[%s1 + $0x28] sm:$0xff]
    %v35 = vld [vmem:[%s1 + $0x30] sm:$0x1]
    %v36 = vld [vmem:[#allocation2] sm:$0xff]
    %v37 = vld [vmem:[#allocation2 + $0x8] sm:$0xff]
    %v38 = vld [vmem:[#allocation2 + $0x10] sm:$0xff]
    %v39 = vld [vmem:[#allocation2 + $0x18] sm:$0xff]
    %v40 = vld [vmem:[#allocation2 + $0x20] sm:$0xff]
    %v41 = vld [vmem:[#allocation2 + $0x28] sm:$0xff]
    %v42 = vld [vmem:[#allocation2 + $0x30] sm:$0xff]
    %v43 = vld [vmem:[#allocation2 + $0x38] sm:$0xff]
    %v44 = vlaneseq
    %v45 = vshrl.u32 %v44, 7
    %v46 = vsub.s32 0, %v45
    %v47 = vrot.slane %v35, %v46
    %vm48 = vcmask 130048
    %v50 = vsel %vm48, %v36, 0
    %v53 = vsel %vm48, %v37, 0
    %v56 = vsel %vm48, %v38, 0
    %v59 = vsel %vm48, %v39, 0
    %v62 = vsel %vm48, %v40, 0
    %v65 = vsel %vm48, %v41, 0
    %v68 = vsel %vm48, %v42, 0
    %v71 = vsel %vm48, %v43, 0
    %73 = vmatprep.subr.mxu0 0.0
    %74 = vmatpush1.msra.mxu0 %v29
    %75 = vmatprep.subr.mxu0 0.0
    %76 = vmatpush1.msra.mxu0 %v30
    %77 = vmatprep.subr.mxu0 0.0
    %78 = vmatpush1.msra.mxu0 0.0
    %79 = vmatprep.subr.mxu0 0.0
    %80 = vmatpush1.msra.mxu0 0.0
    %81 = vmatprep.subr.mxu0 0.0
    %82 = vmatpush1.msra.mxu0 0.0
    %83 = vmatprep.subr.mxu0 0.0
    %84 = vmatpush1.msra.mxu0 0.0
    %85 = vmatprep.subr.mxu0 0.0
    %86 = vmatpush1.msra.mxu0 0.0
    %87 = vmatprep.subr.mxu0 0.0
    %88 = vmatpush1.msra.mxu0 0.0
    %89 = vmatprep.subr.mxu0 0.0
    %90 = vmatpush1.msra.mxu0 0.0
    %91 = vmatprep.subr.mxu0 0.0
    %92 = vmatpush1.msra.mxu0 0.0
    %93 = vmatprep.subr.mxu0 0.0
    %94 = vmatpush1.msra.mxu0 0.0
    %95 = vmatprep.subr.mxu0 0.0
    %96 = vmatpush1.msra.mxu0 0.0
    %97 = vmatprep.subr.mxu0 0.0
    %98 = vmatpush1.msra.mxu0 0.0
    %99 = vmatprep.subr.mxu0 0.0
    %100 = vmatpush1.msra.mxu0 0.0
    %101 = vmatprep.subr.mxu0 0.0
    %102 = vmatpush1.msra.mxu0 0.0
    %103 = vmatprep.subr.mxu0 0.0
    %104 = vmatpush1.msra.mxu0 0.0
    %105 = vmatprep.subr.mxu0 0.0
    %106 = vmatpush1.msra.mxu0 0.0
    %107 = vmatprep.subr.mxu0 0.0
    %108 = vmatpush1.msra.mxu0 0.0
    %109 = vmatprep.subr.mxu0 0.0
    %110 = vmatpush1.msra.mxu0 0.0
    %111 = vmatprep.subr.mxu0 0.0
    %112 = vmatpush1.msra.mxu0 0.0
    %113 = vmatprep.subr.mxu0 0.0
    %114 = vmatpush1.msra.mxu0 0.0
    %115 = vmatprep.subr.mxu0 0.0
    %116 = vmatpush1.msra.mxu0 0.0
    %117 = vmatprep.subr.mxu0 0.0
    %118 = vmatpush1.msra.mxu0 0.0
    %119 = vmatprep.subr.mxu0 0.0
    %120 = vmatpush1.msra.mxu0 0.0
    %121 = vmatprep.subr.mxu0 0.0
    %122 = vmatpush1.msra.mxu0 0.0
    %123 = vmatprep.subr.mxu0 0.0
    %124 = vmatpush1.msra.mxu0 0.0
    %125 = vmatprep.subr.mxu0 0.0
    %126 = vmatpush1.msra.mxu0 0.0
    %127 = vmatprep.subr.mxu0 0.0
    %128 = vmatpush1.msra.mxu0 0.0
    %129 = vmatprep.subr.mxu0 0.0
    %130 = vmatpush1.msra.mxu0 0.0
    %131 = vmatprep.subr.mxu0 0.0
    %132 = vmatpush1.msra.mxu0 0.0
    %133 = vmatprep.subr.mxu0 0.0
    %134 = vmatpush1.msra.mxu0 0.0
    %135 = vmatprep.subr.mxu0 0.0
    %136 = vmatpush1.msra.mxu0 0.0
    %137 = vmatprep.mubr.f32.mxu0 0.0
    %138 = vmatmul.mubr.f32.gmra.mrb[0].mxu0 %v50
    %v139 = vpop.f32.mrb[0].mxu0
    %v140 = vadd.f32 %v47, %v139
    %v141 = vpop.f32.mrb[0].mxu0
    %142 = vmatprep.mubr.f32.mxu0 0.0
    %143 = vmatmul.mubr.f32.gmra.mrb[0].mxu0 %v53
    %v144 = vpop.f32.mrb[0].mxu0
    %v145 = vadd.f32 %v47, %v144
    %v146 = vpop.f32.mrb[0].mxu0
    %147 = vmatprep.mubr.f32.mxu0 0.0
    %148 = vmatmul.mubr.f32.gmra.mrb[0].mxu0 %v56
    %v149 = vpop.f32.mrb[0].mxu0
    %v150 = vadd.f32 %v47, %v149
    %v151 = vpop.f32.mrb[0].mxu0
    %152 = vmatprep.mubr.f32.mxu0 0.0
    %153 = vmatmul.mubr.f32.gmra.mrb[0].mxu0 %v59
    %v154 = vpop.f32.mrb[0].mxu0
    %v155 = vadd.f32 %v47, %v154
    %v156 = vpop.f32.mrb[0].mxu0
    %157 = vmatprep.mubr.f32.mxu0 0.0
    %158 = vmatmul.mubr.f32.gmra.mrb[0].mxu0 %v62
    %v159 = vpop.f32.mrb[0].mxu0
    %v160 = vadd.f32 %v47, %v159
    %v161 = vpop.f32.mrb[0].mxu0
    %162 = vmatprep.mubr.f32.mxu0 0.0
    %163 = vmatmul.mubr.f32.gmra.mrb[0].mxu0 %v65
    %v164 = vpop.f32.mrb[0].mxu0
    %v165 = vadd.f32 %v47, %v164
    %v166 = vpop.f32.mrb[0].mxu0
    %167 = vmatprep.mubr.f32.mxu0 0.0
    %168 = vmatmul.mubr.f32.gmra.mrb[0].mxu0 %v68
    %v169 = vpop.f32.mrb[0].mxu0
    %v170 = vadd.f32 %v47, %v169
    %v171 = vpop.f32.mrb[0].mxu0
    %172 = vmatprep.mubr.f32.mxu0 0.0
    %173 = vmatmul.mubr.f32.gmra.mrb[0].mxu0 %v71
    %v174 = vpop.f32.mrb[0].mxu0
    %v175 = vadd.f32 %v47, %v174
    %v176 = vpop.f32.mrb[0].mxu0
    %177 = vdwg.mxu0
    %vm178 = vcmask 261120
    %v180 = vsel %vm178, 0.0, 0
    %182 = vmatprep.subr.mxu0 0.0
    %183 = vmatpush1.msra.mxu0 %v31
    %184 = vmatprep.subr.mxu0 0.0
    %185 = vmatpush1.msra.mxu0 %v32
    %186 = vmatprep.subr.mxu0 0.0
    %187 = vmatpush1.msra.mxu0 %v33
    %188 = vmatprep.subr.mxu0 0.0
    %189 = vmatpush1.msra.mxu0 %v34
    %190 = vmatprep.subr.mxu0 0.0
    %191 = vmatpush1.msra.mxu0 0.0
    %192 = vmatprep.subr.mxu0 0.0
    %193 = vmatpush1.msra.mxu0 0.0
    %194 = vmatprep.subr.mxu0 0.0
    %195 = vmatpush1.msra.mxu0 0.0
    %196 = vmatprep.subr.mxu0 0.0
    %197 = vmatpush1.msra.mxu0 0.0
    %198 = vmatprep.subr.mxu0 0.0
    %199 = vmatpush1.msra.mxu0 0.0
    %200 = vmatprep.subr.mxu0 0.0
    %201 = vmatpush1.msra.mxu0 0.0
    %202 = vmatprep.subr.mxu0 0.0
    %203 = vmatpush1.msra.mxu0 0.0
    %204 = vmatprep.subr.mxu0 0.0
    %205 = vmatpush1.msra.mxu0 0.0
    %206 = vmatprep.subr.mxu0 0.0
    %207 = vmatpush1.msra.mxu0 0.0
    %208 = vmatprep.subr.mxu0 0.0
    %209 = vmatpush1.msra.mxu0 0.0
    %210 = vmatprep.subr.mxu0 0.0
    %211 = vmatpush1.msra.mxu0 0.0
    %212 = vmatprep.subr.mxu0 0.0
    %213 = vmatpush1.msra.mxu0 0.0
    %214 = vmatprep.subr.mxu0 0.0
    %215 = vmatpush1.msra.mxu0 0.0
    %216 = vmatprep.subr.mxu0 0.0
    %217 = vmatpush1.msra.mxu0 0.0
    %218 = vmatprep.subr.mxu0 0.0
    %219 = vmatpush1.msra.mxu0 0.0
    %220 = vmatprep.subr.mxu0 0.0
    %221 = vmatpush1.msra.mxu0 0.0
    %222 = vmatprep.subr.mxu0 0.0
    %223 = vmatpush1.msra.mxu0 0.0
    %224 = vmatprep.subr.mxu0 0.0
    %225 = vmatpush1.msra.mxu0 0.0
    %226 = vmatprep.subr.mxu0 0.0
    %227 = vmatpush1.msra.mxu0 0.0
    %228 = vmatprep.subr.mxu0 0.0
    %229 = vmatpush1.msra.mxu0 0.0
    %230 = vmatprep.subr.mxu0 0.0
    %231 = vmatpush1.msra.mxu0 0.0
    %232 = vmatprep.subr.mxu0 0.0
    %233 = vmatpush1.msra.mxu0 0.0
    %234 = vmatprep.subr.mxu0 0.0
    %235 = vmatpush1.msra.mxu0 0.0
    %236 = vmatprep.subr.mxu0 0.0
    %237 = vmatpush1.msra.mxu0 0.0
    %238 = vmatprep.subr.mxu0 0.0
    %239 = vmatpush1.msra.mxu0 0.0
    %240 = vmatprep.subr.mxu0 0.0
    %241 = vmatpush1.msra.mxu0 0.0
    %242 = vmatprep.subr.mxu0 0.0
    %243 = vmatpush1.msra.mxu0 0.0
    %244 = vmatprep.subr.mxu0 0.0
    %245 = vmatpush1.msra.mxu0 0.0
    %246 = vmatprep.mubr.f32.mxu0 0.0
    %247 = vmatmul.mubr.f32.gmra.mrb[0].mxu0 %v180
    %v248 = vpop.f32.mrb[0].mxu0
    %v249 = vadd.f32 0.0, %v248
    %v250 = vpop.f32.mrb[0].mxu0
    %251 = vdwg.mxu0
    %v252 = vadd.f32 %v140, %v249
    %v253 = vmul.f32 %v252, 0.5
    %v254 = vtanh.pop %v253
    %v255 = vadd.f32 %v254, 1.0
    %v256 = vmul.f32 %v255, 0.5
    %v257 = vtanh.pop %v252
    %v258 = vmul.f32 %v256, 0.0
    %260 = vrot.lane.b32.xlu0 %v257, 64
    %v261 = vpop.permute.xlu0 %260
    %v263 = vmul.f32 %v256, %v261
    %265 = vrot.lane.b32.xlu0 %v263, 32
    %v266 = vpop.permute.xlu0 %265
    %v268 = vadd.f32 %v258, %v266
    %v269 = vtanh.pop %v268
    %271 = vrot.lane.b32.xlu0 %v269, 64
    %v272 = vpop.permute.xlu0 %271
    %v274 = vmul.f32 %v256, %v272
    %276 = vrot.lane.b32.xlu0 %v274, 32
    %v277 = vpop.permute.xlu0 %276
    %v278 = vsel %vm178, %v277, 0
    %280 = vmatprep.subr.mxu0 0.0
    %281 = vmatpush1.msra.mxu0 %v31
    %282 = vmatprep.subr.mxu0 0.0
    %283 = vmatpush1.msra.mxu0 %v32
    %284 = vmatprep.subr.mxu0 0.0
    %285 = vmatpush1.msra.mxu0 %v33
    %286 = vmatprep.subr.mxu0 0.0
    %287 = vmatpush1.msra.mxu0 %v34
    %288 = vmatprep.subr.mxu0 0.0
    %289 = vmatpush1.msra.mxu0 0.0
    %290 = vmatprep.subr.mxu0 0.0
    %291 = vmatpush1.msra.mxu0 0.0
    %292 = vmatprep.subr.mxu0 0.0
    %293 = vmatpush1.msra.mxu0 0.0
    %294 = vmatprep.subr.mxu0 0.0
    %295 = vmatpush1.msra.mxu0 0.0
    %296 = vmatprep.subr.mxu0 0.0
    %297 = vmatpush1.msra.mxu0 0.0
    %298 = vmatprep.subr.mxu0 0.0
    %299 = vmatpush1.msra.mxu0 0.0
    %300 = vmatprep.subr.mxu0 0.0
    %301 = vmatpush1.msra.mxu0 0.0
    %302 = vmatprep.subr.mxu0 0.0
    %303 = vmatpush1.msra.mxu0 0.0
    %304 = vmatprep.subr.mxu0 0.0
    %305 = vmatpush1.msra.mxu0 0.0
    %306 = vmatprep.subr.mxu0 0.0
    %307 = vmatpush1.msra.mxu0 0.0
    %308 = vmatprep.subr.mxu0 0.0
    %309 = vmatpush1.msra.mxu0 0.0
    %310 = vmatprep.subr.mxu0 0.0
    %311 = vmatpush1.msra.mxu0 0.0
    %312 = vmatprep.subr.mxu0 0.0
    %313 = vmatpush1.msra.mxu0 0.0
    %314 = vmatprep.subr.mxu0 0.0
    %315 = vmatpush1.msra.mxu0 0.0
    %316 = vmatprep.subr.mxu0 0.0
    %317 = vmatpush1.msra.mxu0 0.0
    %318 = vmatprep.subr.mxu0 0.0
    %319 = vmatpush1.msra.mxu0 0.0
    %320 = vmatprep.subr.mxu0 0.0
    %321 = vmatpush1.msra.mxu0 0.0
    %322 = vmatprep.subr.mxu0 0.0
    %323 = vmatpush1.msra.mxu0 0.0
    %324 = vmatprep.subr.mxu0 0.0
    %325 = vmatpush1.msra.mxu0 0.0
    %326 = vmatprep.subr.mxu0 0.0
    %327 = vmatpush1.msra.mxu0 0.0
    %328 = vmatprep.subr.mxu0 0.0
    %329 = vmatpush1.msra.mxu0 0.0
    %330 = vmatprep.subr.mxu0 0.0
    %331 = vmatpush1.msra.mxu0 0.0
    %332 = vmatprep.subr.mxu0 0.0
    %333 = vmatpush1.msra.mxu0 0.0
    %334 = vmatprep.subr.mxu0 0.0
    %335 = vmatpush1.msra.mxu0 0.0
    %336 = vmatprep.subr.mxu0 0.0
    %337 = vmatpush1.msra.mxu0 0.0
    %338 = vmatprep.subr.mxu0 0.0
    %339 = vmatpush1.msra.mxu0 0.0
    %340 = vmatprep.subr.mxu0 0.0
    %341 = vmatpush1.msra.mxu0 0.0
    %342 = vmatprep.subr.mxu0 0.0
    %343 = vmatpush1.msra.mxu0 0.0
    %344 = vmatprep.mubr.f32.mxu0 0.0
    %345 = vmatmul.mubr.f32.gmra.mrb[0].mxu0 %v278
    %v346 = vpop.f32.mrb[0].mxu0
    %v347 = vadd.f32 0.0, %v346
    %v348 = vpop.f32.mrb[0].mxu0
    %349 = vdwg.mxu0
    %v350 = vadd.f32 %v145, %v347
    %v351 = vmul.f32 %v350, 0.5
    %v352 = vtanh.pop %v351
    %v353 = vadd.f32 %v352, 1.0
    %v354 = vmul.f32 %v353, 0.5
    %v355 = vtanh.pop %v350
    %v356 = vmul.f32 %v354, %v268
    %358 = vrot.lane.b32.xlu0 %v355, 64
    %v359 = vpop.permute.xlu0 %358
    %v361 = vmul.f32 %v354, %v359
    %363 = vrot.lane.b32.xlu0 %v361, 32
    %v364 = vpop.permute.xlu0 %363
    %v366 = vadd.f32 %v356, %v364
    %v367 = vtanh.pop %v366
    %369 = vrot.lane.b32.xlu0 %v367, 64
    %v370 = vpop.permute.xlu0 %369
    %v372 = vmul.f32 %v354, %v370
    %374 = vrot.lane.b32.xlu0 %v372, 32
    %v375 = vpop.permute.xlu0 %374
    %v376 = vsel %vm178, %v375, 0
    %378 = vmatprep.subr.mxu0 0.0
    %379 = vmatpush1.msra.mxu0 %v31
    %380 = vmatprep.subr.mxu0 0.0
    %381 = vmatpush1.msra.mxu0 %v32
    %382 = vmatprep.subr.mxu0 0.0
    %383 = vmatpush1.msra.mxu0 %v33
    %384 = vmatprep.subr.mxu0 0.0
    %385 = vmatpush1.msra.mxu0 %v34
    %386 = vmatprep.subr.mxu0 0.0
    %387 = vmatpush1.msra.mxu0 0.0
    %388 = vmatprep.subr.mxu0 0.0
    %389 = vmatpush1.msra.mxu0 0.0
    %390 = vmatprep.subr.mxu0 0.0
    %391 = vmatpush1.msra.mxu0 0.0
    %392 = vmatprep.subr.mxu0 0.0
    %393 = vmatpush1.msra.mxu0 0.0
    %394 = vmatprep.subr.mxu0 0.0
    %395 = vmatpush1.msra.mxu0 0.0
    %396 = vmatprep.subr.mxu0 0.0
    %397 = vmatpush1.msra.mxu0 0.0
    %398 = vmatprep.subr.mxu0 0.0
    %399 = vmatpush1.msra.mxu0 0.0
    %400 = vmatprep.subr.mxu0 0.0
    %401 = vmatpush1.msra.mxu0 0.0
    %402 = vmatprep.subr.mxu0 0.0
    %403 = vmatpush1.msra.mxu0 0.0
    %404 = vmatprep.subr.mxu0 0.0
    %405 = vmatpush1.msra.mxu0 0.0
    %406 = vmatprep.subr.mxu0 0.0
    %407 = vmatpush1.msra.mxu0 0.0
    %408 = vmatprep.subr.mxu0 0.0
    %409 = vmatpush1.msra.mxu0 0.0
    %410 = vmatprep.subr.mxu0 0.0
    %411 = vmatpush1.msra.mxu0 0.0
    %412 = vmatprep.subr.mxu0 0.0
    %413 = vmatpush1.msra.mxu0 0.0
    %414 = vmatprep.subr.mxu0 0.0
    %415 = vmatpush1.msra.mxu0 0.0
    %416 = vmatprep.subr.mxu0 0.0
    %417 = vmatpush1.msra.mxu0 0.0
    %418 = vmatprep.subr.mxu0 0.0
    %419 = vmatpush1.msra.mxu0 0.0
    %420 = vmatprep.subr.mxu0 0.0
    %421 = vmatpush1.msra.mxu0 0.0
    %422 = vmatprep.subr.mxu0 0.0
    %423 = vmatpush1.msra.mxu0 0.0
    %424 = vmatprep.subr.mxu0 0.0
    %425 = vmatpush1.msra.mxu0 0.0
    %426 = vmatprep.subr.mxu0 0.0
    %427 = vmatpush1.msra.mxu0 0.0
    %428 = vmatprep.subr.mxu0 0.0
    %429 = vmatpush1.msra.mxu0 0.0
    %430 = vmatprep.subr.mxu0 0.0
    %431 = vmatpush1.msra.mxu0 0.0
    %432 = vmatprep.subr.mxu0 0.0
    %433 = vmatpush1.msra.mxu0 0.0
    %434 = vmatprep.subr.mxu0 0.0
    %435 = vmatpush1.msra.mxu0 0.0
    %436 = vmatprep.subr.mxu0 0.0
    %437 = vmatpush1.msra.mxu0 0.0
    %438 = vmatprep.subr.mxu0 0.0
    %439 = vmatpush1.msra.mxu0 0.0
    %440 = vmatprep.subr.mxu0 0.0
    %441 = vmatpush1.msra.mxu0 0.0
    %442 = vmatprep.mubr.f32.mxu0 0.0
    %443 = vmatmul.mubr.f32.gmra.mrb[0].mxu0 %v376
    %v444 = vpop.f32.mrb[0].mxu0
    %v445 = vadd.f32 0.0, %v444
    %v446 = vpop.f32.mrb[0].mxu0
    %447 = vdwg.mxu0
    %v448 = vadd.f32 %v150, %v445
    %v449 = vmul.f32 %v448, 0.5
    %v450 = vtanh.pop %v449
    %v451 = vadd.f32 %v450, 1.0
    %v452 = vmul.f32 %v451, 0.5
    %v453 = vtanh.pop %v448
    %v454 = vmul.f32 %v452, %v366
    %456 = vrot.lane.b32.xlu0 %v453, 64
    %v457 = vpop.permute.xlu0 %456
    %v459 = vmul.f32 %v452, %v457
    %461 = vrot.lane.b32.xlu0 %v459, 32
    %v462 = vpop.permute.xlu0 %461
    %v464 = vadd.f32 %v454, %v462
    %v465 = vtanh.pop %v464
    %467 = vrot.lane.b32.xlu0 %v465, 64
    %v468 = vpop.permute.xlu0 %467
    %v470 = vmul.f32 %v452, %v468
    %472 = vrot.lane.b32.xlu0 %v470, 32
    %v473 = vpop.permute.xlu0 %472
    %v474 = vsel %vm178, %v473, 0
    %476 = vmatprep.subr.mxu0 0.0
    %477 = vmatpush1.msra.mxu0 %v31
    %478 = vmatprep.subr.mxu0 0.0
    %479 = vmatpush1.msra.mxu0 %v32
    %480 = vmatprep.subr.mxu0 0.0
    %481 = vmatpush1.msra.mxu0 %v33
    %482 = vmatprep.subr.mxu0 0.0
    %483 = vmatpush1.msra.mxu0 %v34
    %484 = vmatprep.subr.mxu0 0.0
    %485 = vmatpush1.msra.mxu0 0.0
    %486 = vmatprep.subr.mxu0 0.0
    %487 = vmatpush1.msra.mxu0 0.0
    %488 = vmatprep.subr.mxu0 0.0
    %489 = vmatpush1.msra.mxu0 0.0
    %490 = vmatprep.subr.mxu0 0.0
    %491 = vmatpush1.msra.mxu0 0.0
    %492 = vmatprep.subr.mxu0 0.0
    %493 = vmatpush1.msra.mxu0 0.0
    %494 = vmatprep.subr.mxu0 0.0
    %495 = vmatpush1.msra.mxu0 0.0
    %496 = vmatprep.subr.mxu0 0.0
    %497 = vmatpush1.msra.mxu0 0.0
    %498 = vmatprep.subr.mxu0 0.0
    %499 = vmatpush1.msra.mxu0 0.0
    %500 = vmatprep.subr.mxu0 0.0
    %501 = vmatpush1.msra.mxu0 0.0
    %502 = vmatprep.subr.mxu0 0.0
    %503 = vmatpush1.msra.mxu0 0.0
    %504 = vmatprep.subr.mxu0 0.0
    %505 = vmatpush1.msra.mxu0 0.0
    %506 = vmatprep.subr.mxu0 0.0
    %507 = vmatpush1.msra.mxu0 0.0
    %508 = vmatprep.subr.mxu0 0.0
    %509 = vmatpush1.msra.mxu0 0.0
    %510 = vmatprep.subr.mxu0 0.0
    %511 = vmatpush1.msra.mxu0 0.0
    %512 = vmatprep.subr.mxu0 0.0
    %513 = vmatpush1.msra.mxu0 0.0
    %514 = vmatprep.subr.mxu0 0.0
    %515 = vmatpush1.msra.mxu0 0.0
    %516 = vmatprep.subr.mxu0 0.0
    %517 = vmatpush1.msra.mxu0 0.0
    %518 = vmatprep.subr.mxu0 0.0
    %519 = vmatpush1.msra.mxu0 0.0
    %520 = vmatprep.subr.mxu0 0.0
    %521 = vmatpush1.msra.mxu0 0.0
    %522 = vmatprep.subr.mxu0 0.0
    %523 = vmatpush1.msra.mxu0 0.0
    %524 = vmatprep.subr.mxu0 0.0
    %525 = vmatpush1.msra.mxu0 0.0
    %526 = vmatprep.subr.mxu0 0.0
    %527 = vmatpush1.msra.mxu0 0.0
    %528 = vmatprep.subr.mxu0 0.0
    %529 = vmatpush1.msra.mxu0 0.0
    %530 = vmatprep.subr.mxu0 0.0
    %531 = vmatpush1.msra.mxu0 0.0
    %532 = vmatprep.subr.mxu0 0.0
    %533 = vmatpush1.msra.mxu0 0.0
    %534 = vmatprep.subr.mxu0 0.0
    %535 = vmatpush1.msra.mxu0 0.0
    %536 = vmatprep.subr.mxu0 0.0
    %537 = vmatpush1.msra.mxu0 0.0
    %538 = vmatprep.subr.mxu0 0.0
    %539 = vmatpush1.msra.mxu0 0.0
    %540 = vmatprep.mubr.f32.mxu0 0.0
    %541 = vmatmul.mubr.f32.gmra.mrb[0].mxu0 %v474
    %v542 = vpop.f32.mrb[0].mxu0
    %v543 = vadd.f32 0.0, %v542
    %v544 = vpop.f32.mrb[0].mxu0
    %545 = vdwg.mxu0
    %v546 = vadd.f32 %v155, %v543
    %v547 = vmul.f32 %v546, 0.5
    %v548 = vtanh.pop %v547
    %v549 = vadd.f32 %v548, 1.0
    %v550 = vmul.f32 %v549, 0.5
    %v551 = vtanh.pop %v546
    %v552 = vmul.f32 %v550, %v464
    %554 = vrot.lane.b32.xlu0 %v551, 64
    %v555 = vpop.permute.xlu0 %554
    %v557 = vmul.f32 %v550, %v555
    %559 = vrot.lane.b32.xlu0 %v557, 32
    %v560 = vpop.permute.xlu0 %559
    %v562 = vadd.f32 %v552, %v560
    %v563 = vtanh.pop %v562
    %565 = vrot.lane.b32.xlu0 %v563, 64
    %v566 = vpop.permute.xlu0 %565
    %v568 = vmul.f32 %v550, %v566
    %570 = vrot.lane.b32.xlu0 %v568, 32
    %v571 = vpop.permute.xlu0 %570
    %v572 = vsel %vm178, %v571, 0
    %574 = vmatprep.subr.mxu0 0.0
    %575 = vmatpush1.msra.mxu0 %v31
    %576 = vmatprep.subr.mxu0 0.0
    %577 = vmatpush1.msra.mxu0 %v32
    %578 = vmatprep.subr.mxu0 0.0
    %579 = vmatpush1.msra.mxu0 %v33
    %580 = vmatprep.subr.mxu0 0.0
    %581 = vmatpush1.msra.mxu0 %v34
    %582 = vmatprep.subr.mxu0 0.0
    %583 = vmatpush1.msra.mxu0 0.0
    %584 = vmatprep.subr.mxu0 0.0
    %585 = vmatpush1.msra.mxu0 0.0
    %586 = vmatprep.subr.mxu0 0.0
    %587 = vmatpush1.msra.mxu0 0.0
    %588 = vmatprep.subr.mxu0 0.0
    %589 = vmatpush1.msra.mxu0 0.0
    %590 = vmatprep.subr.mxu0 0.0
    %591 = vmatpush1.msra.mxu0 0.0
    %592 = vmatprep.subr.mxu0 0.0
    %593 = vmatpush1.msra.mxu0 0.0
    %594 = vmatprep.subr.mxu0 0.0
    %595 = vmatpush1.msra.mxu0 0.0
    %596 = vmatprep.subr.mxu0 0.0
    %597 = vmatpush1.msra.mxu0 0.0
    %598 = vmatprep.subr.mxu0 0.0
    %599 = vmatpush1.msra.mxu0 0.0
    %600 = vmatprep.subr.mxu0 0.0
    %601 = vmatpush1.msra.mxu0 0.0
    %602 = vmatprep.subr.mxu0 0.0
    %603 = vmatpush1.msra.mxu0 0.0
    %604 = vmatprep.subr.mxu0 0.0
    %605 = vmatpush1.msra.mxu0 0.0
    %606 = vmatprep.subr.mxu0 0.0
    %607 = vmatpush1.msra.mxu0 0.0
    %608 = vmatprep.subr.mxu0 0.0
    %609 = vmatpush1.msra.mxu0 0.0
    %610 = vmatprep.subr.mxu0 0.0
    %611 = vmatpush1.msra.mxu0 0.0
    %612 = vmatprep.subr.mxu0 0.0
    %613 = vmatpush1.msra.mxu0 0.0
    %614 = vmatprep.subr.mxu0 0.0
    %615 = vmatpush1.msra.mxu0 0.0
    %616 = vmatprep.subr.mxu0 0.0
    %617 = vmatpush1.msra.mxu0 0.0
    %618 = vmatprep.subr.mxu0 0.0
    %619 = vmatpush1.msra.mxu0 0.0
    %620 = vmatprep.subr.mxu0 0.0
    %621 = vmatpush1.msra.mxu0 0.0
    %622 = vmatprep.subr.mxu0 0.0
    %623 = vmatpush1.msra.mxu0 0.0
    %624 = vmatprep.subr.mxu0 0.0
    %625 = vmatpush1.msra.mxu0 0.0
    %626 = vmatprep.subr.mxu0 0.0
    %627 = vmatpush1.msra.mxu0 0.0
    %628 = vmatprep.subr.mxu0 0.0
    %629 = vmatpush1.msra.mxu0 0.0
    %630 = vmatprep.subr.mxu0 0.0
    %631 = vmatpush1.msra.mxu0 0.0
    %632 = vmatprep.subr.mxu0 0.0
    %633 = vmatpush1.msra.mxu0 0.0
    %634 = vmatprep.subr.mxu0 0.0
    %635 = vmatpush1.msra.mxu0 0.0
    %636 = vmatprep.subr.mxu0 0.0
    %637 = vmatpush1.msra.mxu0 0.0
    %638 = vmatprep.mubr.f32.mxu0 0.0
    %639 = vmatmul.mubr.f32.gmra.mrb[0].mxu0 %v572
    %v640 = vpop.f32.mrb[0].mxu0
    %v641 = vadd.f32 0.0, %v640
    %v642 = vpop.f32.mrb[0].mxu0
    %643 = vdwg.mxu0
    %v644 = vadd.f32 %v160, %v641
    %v645 = vmul.f32 %v644, 0.5
    %v646 = vtanh.pop %v645
    %v647 = vadd.f32 %v646, 1.0
    %v648 = vmul.f32 %v647, 0.5
    %v649 = vtanh.pop %v644
    %v650 = vmul.f32 %v648, %v562
    %652 = vrot.lane.b32.xlu0 %v649, 64
    %v653 = vpop.permute.xlu0 %652
    %v655 = vmul.f32 %v648, %v653
    %657 = vrot.lane.b32.xlu0 %v655, 32
    %v658 = vpop.permute.xlu0 %657
    %v660 = vadd.f32 %v650, %v658
    %v661 = vtanh.pop %v660
    %663 = vrot.lane.b32.xlu0 %v661, 64
    %v664 = vpop.permute.xlu0 %663
    %v666 = vmul.f32 %v648, %v664
    %668 = vrot.lane.b32.xlu0 %v666, 32
    %v669 = vpop.permute.xlu0 %668
    %v670 = vsel %vm178, %v669, 0
    %672 = vmatprep.subr.mxu0 0.0
    %673 = vmatpush1.msra.mxu0 %v31
    %674 = vmatprep.subr.mxu0 0.0
    %675 = vmatpush1.msra.mxu0 %v32
    %676 = vmatprep.subr.mxu0 0.0
    %677 = vmatpush1.msra.mxu0 %v33
    %678 = vmatprep.subr.mxu0 0.0
    %679 = vmatpush1.msra.mxu0 %v34
    %680 = vmatprep.subr.mxu0 0.0
    %681 = vmatpush1.msra.mxu0 0.0
    %682 = vmatprep.subr.mxu0 0.0
    %683 = vmatpush1.msra.mxu0 0.0
    %684 = vmatprep.subr.mxu0 0.0
    %685 = vmatpush1.msra.mxu0 0.0
    %686 = vmatprep.subr.mxu0 0.0
    %687 = vmatpush1.msra.mxu0 0.0
    %688 = vmatprep.subr.mxu0 0.0
    %689 = vmatpush1.msra.mxu0 0.0
    %690 = vmatprep.subr.mxu0 0.0
    %691 = vmatpush1.msra.mxu0 0.0
    %692 = vmatprep.subr.mxu0 0.0
    %693 = vmatpush1.msra.mxu0 0.0
    %694 = vmatprep.subr.mxu0 0.0
    %695 = vmatpush1.msra.mxu0 0.0
    %696 = vmatprep.subr.mxu0 0.0
    %697 = vmatpush1.msra.mxu0 0.0
    %698 = vmatprep.subr.mxu0 0.0
    %699 = vmatpush1.msra.mxu0 0.0
    %700 = vmatprep.subr.mxu0 0.0
    %701 = vmatpush1.msra.mxu0 0.0
    %702 = vmatprep.subr.mxu0 0.0
    %703 = vmatpush1.msra.mxu0 0.0
    %704 = vmatprep.subr.mxu0 0.0
    %705 = vmatpush1.msra.mxu0 0.0
    %706 = vmatprep.subr.mxu0 0.0
    %707 = vmatpush1.msra.mxu0 0.0
    %708 = vmatprep.subr.mxu0 0.0
    %709 = vmatpush1.msra.mxu0 0.0
    %710 = vmatprep.subr.mxu0 0.0
    %711 = vmatpush1.msra.mxu0 0.0
    %712 = vmatprep.subr.mxu0 0.0
    %713 = vmatpush1.msra.mxu0 0.0
    %714 = vmatprep.subr.mxu0 0.0
    %715 = vmatpush1.msra.mxu0 0.0
    %716 = vmatprep.subr.mxu0 0.0
    %717 = vmatpush1.msra.mxu0 0.0
    %718 = vmatprep.subr.mxu0 0.0
    %719 = vmatpush1.msra.mxu0 0.0
    %720 = vmatprep.subr.mxu0 0.0
    %721 = vmatpush1.msra.mxu0 0.0
    %722 = vmatprep.subr.mxu0 0.0
    %723 = vmatpush1.msra.mxu0 0.0
    %724 = vmatprep.subr.mxu0 0.0
    %725 = vmatpush1.msra.mxu0 0.0
    %726 = vmatprep.subr.mxu0 0.0
    %727 = vmatpush1.msra.mxu0 0.0
    %728 = vmatprep.subr.mxu0 0.0
    %729 = vmatpush1.msra.mxu0 0.0
    %730 = vmatprep.subr.mxu0 0.0
    %731 = vmatpush1.msra.mxu0 0.0
    %732 = vmatprep.subr.mxu0 0.0
    %733 = vmatpush1.msra.mxu0 0.0
    %734 = vmatprep.subr.mxu0 0.0
    %735 = vmatpush1.msra.mxu0 0.0
    %736 = vmatprep.mubr.f32.mxu0 0.0
    %737 = vmatmul.mubr.f32.gmra.mrb[0].mxu0 %v670
    %v738 = vpop.f32.mrb[0].mxu0
    %v739 = vadd.f32 0.0, %v738
    %v740 = vpop.f32.mrb[0].mxu0
    %741 = vdwg.mxu0
    %v742 = vadd.f32 %v165, %v739
    %v743 = vmul.f32 %v742, 0.5
    %v744 = vtanh.pop %v743
    %v745 = vadd.f32 %v744, 1.0
    %v746 = vmul.f32 %v745, 0.5
    %v747 = vtanh.pop %v742
    %v748 = vmul.f32 %v746, %v660
    %750 = vrot.lane.b32.xlu0 %v747, 64
    %v751 = vpop.permute.xlu0 %750
    %v753 = vmul.f32 %v746, %v751
    %755 = vrot.lane.b32.xlu0 %v753, 32
    %v756 = vpop.permute.xlu0 %755
    %v758 = vadd.f32 %v748, %v756
    %v759 = vtanh.pop %v758
    %761 = vrot.lane.b32.xlu0 %v759, 64
    %v762 = vpop.permute.xlu0 %761
    %v764 = vmul.f32 %v746, %v762
    %766 = vrot.lane.b32.xlu0 %v764, 32
    %v767 = vpop.permute.xlu0 %766
    %v768 = vsel %vm178, %v767, 0
    %770 = vmatprep.subr.mxu0 0.0
    %771 = vmatpush1.msra.mxu0 %v31
    %772 = vmatprep.subr.mxu0 0.0
    %773 = vmatpush1.msra.mxu0 %v32
    %774 = vmatprep.subr.mxu0 0.0
    %775 = vmatpush1.msra.mxu0 %v33
    %776 = vmatprep.subr.mxu0 0.0
    %777 = vmatpush1.msra.mxu0 %v34
    %778 = vmatprep.subr.mxu0 0.0
    %779 = vmatpush1.msra.mxu0 0.0
    %780 = vmatprep.subr.mxu0 0.0
    %781 = vmatpush1.msra.mxu0 0.0
    %782 = vmatprep.subr.mxu0 0.0
    %783 = vmatpush1.msra.mxu0 0.0
    %784 = vmatprep.subr.mxu0 0.0
    %785 = vmatpush1.msra.mxu0 0.0
    %786 = vmatprep.subr.mxu0 0.0
    %787 = vmatpush1.msra.mxu0 0.0
    %788 = vmatprep.subr.mxu0 0.0
    %789 = vmatpush1.msra.mxu0 0.0
    %790 = vmatprep.subr.mxu0 0.0
    %791 = vmatpush1.msra.mxu0 0.0
    %792 = vmatprep.subr.mxu0 0.0
    %793 = vmatpush1.msra.mxu0 0.0
    %794 = vmatprep.subr.mxu0 0.0
    %795 = vmatpush1.msra.mxu0 0.0
    %796 = vmatprep.subr.mxu0 0.0
    %797 = vmatpush1.msra.mxu0 0.0
    %798 = vmatprep.subr.mxu0 0.0
    %799 = vmatpush1.msra.mxu0 0.0
    %800 = vmatprep.subr.mxu0 0.0
    %801 = vmatpush1.msra.mxu0 0.0
    %802 = vmatprep.subr.mxu0 0.0
    %803 = vmatpush1.msra.mxu0 0.0
    %804 = vmatprep.subr.mxu0 0.0
    %805 = vmatpush1.msra.mxu0 0.0
    %806 = vmatprep.subr.mxu0 0.0
    %807 = vmatpush1.msra.mxu0 0.0
    %808 = vmatprep.subr.mxu0 0.0
    %809 = vmatpush1.msra.mxu0 0.0
    %810 = vmatprep.subr.mxu0 0.0
    %811 = vmatpush1.msra.mxu0 0.0
    %812 = vmatprep.subr.mxu0 0.0
    %813 = vmatpush1.msra.mxu0 0.0
    %814 = vmatprep.subr.mxu0 0.0
    %815 = vmatpush1.msra.mxu0 0.0
    %816 = vmatprep.subr.mxu0 0.0
    %817 = vmatpush1.msra.mxu0 0.0
    %818 = vmatprep.subr.mxu0 0.0
    %819 = vmatpush1.msra.mxu0 0.0
    %820 = vmatprep.subr.mxu0 0.0
    %821 = vmatpush1.msra.mxu0 0.0
    %822 = vmatprep.subr.mxu0 0.0
    %823 = vmatpush1.msra.mxu0 0.0
    %824 = vmatprep.subr.mxu0 0.0
    %825 = vmatpush1.msra.mxu0 0.0
    %826 = vmatprep.subr.mxu0 0.0
    %827 = vmatpush1.msra.mxu0 0.0
    %828 = vmatprep.subr.mxu0 0.0
    %829 = vmatpush1.msra.mxu0 0.0
    %830 = vmatprep.subr.mxu0 0.0
    %831 = vmatpush1.msra.mxu0 0.0
    %832 = vmatprep.subr.mxu0 0.0
    %833 = vmatpush1.msra.mxu0 0.0
    %834 = vmatprep.mubr.f32.mxu0 0.0
    %835 = vmatmul.mubr.f32.gmra.mrb[0].mxu0 %v768
    %v836 = vpop.f32.mrb[0].mxu0
    %v837 = vadd.f32 0.0, %v836
    %v838 = vpop.f32.mrb[0].mxu0
    %839 = vdwg.mxu0
    %v840 = vadd.f32 %v170, %v837
    %v841 = vmul.f32 %v840, 0.5
    %v842 = vtanh.pop %v841
    %v843 = vadd.f32 %v842, 1.0
    %v844 = vmul.f32 %v843, 0.5
    %v845 = vtanh.pop %v840
    %v846 = vmul.f32 %v844, %v758
    %848 = vrot.lane.b32.xlu0 %v845, 64
    %v849 = vpop.permute.xlu0 %848
    %v851 = vmul.f32 %v844, %v849
    %853 = vrot.lane.b32.xlu0 %v851, 32
    %v854 = vpop.permute.xlu0 %853
    %v856 = vadd.f32 %v846, %v854
    %v857 = vtanh.pop %v856
    %859 = vrot.lane.b32.xlu0 %v857, 64
    %v860 = vpop.permute.xlu0 %859
    %v862 = vmul.f32 %v844, %v860
    %864 = vrot.lane.b32.xlu0 %v862, 32
    %v865 = vpop.permute.xlu0 %864
    %v866 = vsel %vm178, %v865, 0
    %868 = vmatprep.subr.mxu0 0.0
    %869 = vmatpush1.msra.mxu0 %v31
    %870 = vmatprep.subr.mxu0 0.0
    %871 = vmatpush1.msra.mxu0 %v32
    %872 = vmatprep.subr.mxu0 0.0
    %873 = vmatpush1.msra.mxu0 %v33
    %874 = vmatprep.subr.mxu0 0.0
    %875 = vmatpush1.msra.mxu0 %v34
    %876 = vmatprep.subr.mxu0 0.0
    %877 = vmatpush1.msra.mxu0 0.0
    %878 = vmatprep.subr.mxu0 0.0
    %879 = vmatpush1.msra.mxu0 0.0
    %880 = vmatprep.subr.mxu0 0.0
    %881 = vmatpush1.msra.mxu0 0.0
    %882 = vmatprep.subr.mxu0 0.0
    %883 = vmatpush1.msra.mxu0 0.0
    %884 = vmatprep.subr.mxu0 0.0
    %885 = vmatpush1.msra.mxu0 0.0
    %886 = vmatprep.subr.mxu0 0.0
    %887 = vmatpush1.msra.mxu0 0.0
    %888 = vmatprep.subr.mxu0 0.0
    %889 = vmatpush1.msra.mxu0 0.0
    %890 = vmatprep.subr.mxu0 0.0
    %891 = vmatpush1.msra.mxu0 0.0
    %892 = vmatprep.subr.mxu0 0.0
    %893 = vmatpush1.msra.mxu0 0.0
    %894 = vmatprep.subr.mxu0 0.0
    %895 = vmatpush1.msra.mxu0 0.0
    %896 = vmatprep.subr.mxu0 0.0
    %897 = vmatpush1.msra.mxu0 0.0
    %898 = vmatprep.subr.mxu0 0.0
    %899 = vmatpush1.msra.mxu0 0.0
    %900 = vmatprep.subr.mxu0 0.0
    %901 = vmatpush1.msra.mxu0 0.0
    %902 = vmatprep.subr.mxu0 0.0
    %903 = vmatpush1.msra.mxu0 0.0
    %904 = vmatprep.subr.mxu0 0.0
    %905 = vmatpush1.msra.mxu0 0.0
    %906 = vmatprep.subr.mxu0 0.0
    %907 = vmatpush1.msra.mxu0 0.0
    %908 = vmatprep.subr.mxu0 0.0
    %909 = vmatpush1.msra.mxu0 0.0
    %910 = vmatprep.subr.mxu0 0.0
    %911 = vmatpush1.msra.mxu0 0.0
    %912 = vmatprep.subr.mxu0 0.0
    %913 = vmatpush1.msra.mxu0 0.0
    %914 = vmatprep.subr.mxu0 0.0
    %915 = vmatpush1.msra.mxu0 0.0
    %916 = vmatprep.subr.mxu0 0.0
    %917 = vmatpush1.msra.mxu0 0.0
    %918 = vmatprep.subr.mxu0 0.0
    %919 = vmatpush1.msra.mxu0 0.0
    %920 = vmatprep.subr.mxu0 0.0
    %921 = vmatpush1.msra.mxu0 0.0
    %922 = vmatprep.subr.mxu0 0.0
    %923 = vmatpush1.msra.mxu0 0.0
    %924 = vmatprep.subr.mxu0 0.0
    %925 = vmatpush1.msra.mxu0 0.0
    %926 = vmatprep.subr.mxu0 0.0
    %927 = vmatpush1.msra.mxu0 0.0
    %928 = vmatprep.subr.mxu0 0.0
    %929 = vmatpush1.msra.mxu0 0.0
    %930 = vmatprep.subr.mxu0 0.0
    %931 = vmatpush1.msra.mxu0 0.0
    %932 = vmatprep.mubr.f32.mxu0 0.0
    %933 = vmatmul.mubr.f32.gmra.mrb[0].mxu0 %v866
    %v934 = vpop.f32.mrb[0].mxu0
    %v935 = vadd.f32 0.0, %v934
    %v936 = vpop.f32.mrb[0].mxu0
    %937 = vdwg.mxu0
    %v938 = vadd.f32 %v175, %v935
    %v939 = vmul.f32 %v938, 0.5
    %v940 = vtanh.pop %v939
    %v941 = vadd.f32 %v940, 1.0
    %v942 = vmul.f32 %v941, 0.5
    %v943 = vtanh.pop %v938
    %v944 = vmul.f32 %v942, %v856
    %946 = vrot.lane.b32.xlu0 %v943, 64
    %v947 = vpop.permute.xlu0 %946
    %v949 = vmul.f32 %v942, %v947
    %951 = vrot.lane.b32.xlu0 %v949, 32
    %v952 = vpop.permute.xlu0 %951
    %v954 = vadd.f32 %v944, %v952
    %v955 = vtanh.pop %v954
    %957 = vrot.lane.b32.xlu0 %v955, 64
    %v958 = vpop.permute.xlu0 %957
    %v960 = vmul.f32 %v942, %v958
    %v961 = vld [vmem:[%s2] sm:$0xff]
    %v962 = vld [vmem:[%s2 + $0x8] sm:$0xff]
    %v963 = vld [vmem:[%s2 + $0x10] sm:$0xff]
    %v964 = vld [vmem:[%s2 + $0x18] sm:$0xff]
    %v965 = vld [vmem:[%s2 + $0x20] sm:$0x1]
    %v966 = vlaneseq
    %v967 = vshrl.u32 %v966, 7
    %v968 = vsub.s32 0, %v967
    %v969 = vrot.slane %v965, %v968
    %971 = vrot.lane.b32.xlu0 %v960, 32
    %v972 = vpop.permute.xlu0 %971
    %v973 = vsel %vm178, %v972, 0
    %975 = vmatprep.subr.mxu0 0.0
    %976 = vmatpush1.msra.mxu0 %v961
    %977 = vmatprep.subr.mxu0 0.0
    %978 = vmatpush1.msra.mxu0 %v962
    %979 = vmatprep.subr.mxu0 0.0
    %980 = vmatpush1.msra.mxu0 %v963
    %981 = vmatprep.subr.mxu0 0.0
    %982 = vmatpush1.msra.mxu0 %v964
    %983 = vmatprep.subr.mxu0 0.0
    %984 = vmatpush1.msra.mxu0 0.0
    %985 = vmatprep.subr.mxu0 0.0
    %986 = vmatpush1.msra.mxu0 0.0
    %987 = vmatprep.subr.mxu0 0.0
    %988 = vmatpush1.msra.mxu0 0.0
    %989 = vmatprep.subr.mxu0 0.0
    %990 = vmatpush1.msra.mxu0 0.0
    %991 = vmatprep.subr.mxu0 0.0
    %992 = vmatpush1.msra.mxu0 0.0
    %993 = vmatprep.subr.mxu0 0.0
    %994 = vmatpush1.msra.mxu0 0.0
    %995 = vmatprep.subr.mxu0 0.0
    %996 = vmatpush1.msra.mxu0 0.0
    %997 = vmatprep.subr.mxu0 0.0
    %998 = vmatpush1.msra.mxu0 0.0
    %999 = vmatprep.subr.mxu0 0.0
    %1000 = vmatpush1.msra.mxu0 0.0
    %1001 = vmatprep.subr.mxu0 0.0
    %1002 = vmatpush1.msra.mxu0 0.0
    %1003 = vmatprep.subr.mxu0 0.0
    %1004 = vmatpush1.msra.mxu0 0.0
    %1005 = vmatprep.subr.mxu0 0.0
    %1006 = vmatpush1.msra.mxu0 0.0
    %1007 = vmatprep.subr.mxu0 0.0
    %1008 = vmatpush1.msra.mxu0 0.0
    %1009 = vmatprep.subr.mxu0 0.0
    %1010 = vmatpush1.msra.mxu0 0.0
    %1011 = vmatprep.subr.mxu0 0.0
    %1012 = vmatpush1.msra.mxu0 0.0
    %1013 = vmatprep.subr.mxu0 0.0
    %1014 = vmatpush1.msra.mxu0 0.0
    %1015 = vmatprep.subr.mxu0 0.0
    %1016 = vmatpush1.msra.mxu0 0.0
    %1017 = vmatprep.subr.mxu0 0.0
    %1018 = vmatpush1.msra.mxu0 0.0
    %1019 = vmatprep.subr.mxu0 0.0
    %1020 = vmatpush1.msra.mxu0 0.0
    %1021 = vmatprep.subr.mxu0 0.0
    %1022 = vmatpush1.msra.mxu0 0.0
    %1023 = vmatprep.subr.mxu0 0.0
    %1024 = vmatpush1.msra.mxu0 0.0
    %1025 = vmatprep.subr.mxu0 0.0
    %1026 = vmatpush1.msra.mxu0 0.0
    %1027 = vmatprep.subr.mxu0 0.0
    %1028 = vmatpush1.msra.mxu0 0.0
    %1029 = vmatprep.subr.mxu0 0.0
    %1030 = vmatpush1.msra.mxu0 0.0
    %1031 = vmatprep.subr.mxu0 0.0
    %1032 = vmatpush1.msra.mxu0 0.0
    %1033 = vmatprep.subr.mxu0 0.0
    %1034 = vmatpush1.msra.mxu0 0.0
    %1035 = vmatprep.subr.mxu0 0.0
    %1036 = vmatpush1.msra.mxu0 0.0
    %1037 = vmatprep.subr.mxu0 0.0
    %1038 = vmatpush1.msra.mxu0 0.0
    %1039 = vmatprep.mubr.f32.mxu0 0.0
    %1040 = vmatmul.mubr.f32.gmra.mrb[0].mxu0 %v973
    %v1041 = vpop.f32.mrb[0].mxu0
    %v1042 = vadd.f32 %v969, %v1041
    %v1043 = vpop.f32.mrb[0].mxu0
    %1044 = vdwg.mxu0
    %1045 = vst.msk [vmem:[#allocation5] sm:$0xff] %vm48, %v1042
    // Predicated region
    $region18: #{tpu_custom_call.1} parent=1 // pred_check
      _
    $region19: #{tpu_custom_call.1} parent=1 // pred_check_branch
      %1047 = sbr.rel (0) target = $region21
    $region20: #{tpu_custom_call.1} parent=1 // pred_region
      %s1049 = ssub.s32 128, 128
      %1050 = vsyncadd [#allocation4], %s1049
      %s1052 = sshll.u32 [#allocation5], 4
      %s1053 = int_to_ptr.vmem [resolvable:$true] %s1052
      %1055 = dma.vmem_to_hbm [thread:$0]  %s1053, 128, %s3, [#allocation4]
    $region21: #{tpu_custom_call.1} parent=1 // pred_fallthru
      _
    // Predicated region
    $region22: #{tpu_custom_call.1} parent=1 // pred_check
      _
    $region23: #{tpu_custom_call.1} parent=1 // pred_check_branch
      %1057 = sbr.rel (0) target = $region25
    $region24: #{tpu_custom_call.1} parent=1 // pred_region
      %1058 = dma.done [#allocation4], 128
    $region25: #{tpu_custom_call.1} parent=1 // pred_fallthru
      _
    %1059 = vsyncpa [#allocation3], 1
    %1060 = vsyncpa [#allocation4], 1

</llo_original>
